<compile_context>
chip_gen: v7x
topology: tpu7x:2x2x1
jax: 0.10.0
libtpu: 0.0.40
codegen_flags: <defaults>
</compile_context>

<pallas_src>
import functools

import jax
import jax.numpy as jnp
from jax import lax
from jax.experimental import pallas as pl
from jax.experimental.pallas import tpu as pltpu


def _round_up(x, m):
    return (x + m - 1) // m * m


def _tap_kernel(loss_fn, x_ref, we_ref, be_ref, wp_ref, emb_ref, pred_ref, acc_ref):
    """Grid = (B tiles, T tiles); T is the innermost reduction axis.

    x_ref:   (Bb, Tb, D)  native dtype, streamed (double-buffered by Pallas)
    we_ref:  (D, S) f32  = W_emb^T / T   (mean scale folded in), resident
    be_ref:  (1, S) f32, resident
    wp_ref:  (S, N) f32  = W_pred^T, resident
    emb_ref: (Bb, S), pred_ref: (Bb, N) -- written only on the last T step
    acc_ref: (Bb, D) f32 scratch (time-sum accumulator)
    """
    t = pl.program_id(1)

    @pl.when(t == 0)
    def _():
        acc_ref[...] = jnp.zeros_like(acc_ref)

    # Accumulate the time-sum in f32 (cast per tile; x may be bf16).
    acc_ref[...] += jnp.sum(x_ref[...].astype(jnp.float32), axis=1)

    @pl.when(t == pl.num_programs(1) - 1)
    def _():
        # we_ref already carries the 1/T mean scale, so this is the mean-matmul.
        emb = jnp.dot(acc_ref[...], we_ref[...], preferred_element_type=jnp.float32)
        emb = emb + be_ref[...]  # (1, S) broadcasts over the batch tile

        if loss_fn == "softmax":
            logits = jnp.dot(emb, wp_ref[...], preferred_element_type=jnp.float32)
            m = jnp.max(logits, axis=-1, keepdims=True)
            e = jnp.exp(logits - m)
            denom = jnp.sum(e, axis=-1, keepdims=True)
            pred = e * pl.reciprocal(denom, approx=True)  # EUP slot, off the VALU path
            emb_out = emb
        elif loss_fn == "amsoftmax":
            # F.normalize(emb, p=2, dim=-1): emb / max(||emb||_2, 1e-12)
            nsq = jnp.sum(emb * emb, axis=-1, keepdims=True)
            inv = lax.rsqrt(jnp.maximum(nsq, 1e-24))  # == 1 / max(||emb||, 1e-12)
            emb_out = emb * inv
            pred = jnp.dot(emb_out, wp_ref[...], preferred_element_type=jnp.float32)
        else:
            raise NotImplementedError(loss_fn)

        emb_ref[...] = emb_out.astype(emb_ref.dtype)
        pred_ref[...] = pred.astype(pred_ref.dtype)


def tap_simple_forward(x, w_emb, b_emb, w_pred, loss_fn="softmax",
                       block_b=128, block_t=256):
    """x: (B, T, D) in its native dtype (f32 or bf16).
    w_emb: (spkr_dim, D) like nn.Linear.weight; b_emb: (spkr_dim,);
    w_pred: (spkr_num, spkr_dim). Returns (emb (B,S) f32, pred (B,N) f32)."""
    B, T, D = x.shape
    S = w_emb.shape[0]
    N = w_pred.shape[0]

    # ---- tile selection -------------------------------------------------
    bb = min(block_b, _round_up(B, 8))        # multiple of 8
    B_pad = _round_up(B, bb)

    # Size the T tile so a double-buffered x block stays inside scoped VMEM
    # on every generation (v5e 16 MiB default scoped, v7x 64 MiB physical).
    x_itemsize = jnp.dtype(x.dtype).itemsize
    row_bytes = bb * D * x_itemsize
    budget = 8 * 1024 * 1024                  # per x buffer; Pallas double-buffers
    tb_cap = max(8, (budget // max(row_bytes, 1)) // 8 * 8)
    tb = min(block_t, tb_cap)
    if T <= tb:
        tb, T_pad = T, T                      # full-extent T block is always legal
    else:
        T_pad = _round_up(T, tb)              # zero-pad: zeros don't perturb the sum

    if (B_pad, T_pad) != (B, T):
        x = jnp.pad(x, ((0, B_pad - B), (0, T_pad - T), (0, 0)))

    # ---- weight prep: lane-dense layouts, fold 1/T (mean) into W_emb ----
    we_t = (jnp.transpose(w_emb) / jnp.float32(T)).astype(jnp.float32)  # (D, S)
    wp_t = jnp.transpose(w_pred).astype(jnp.float32)                    # (S, N)
    be = b_emb.reshape(1, S).astype(jnp.float32)                        # (1, S)

    grid = (B_pad // bb, T_pad // tb)
    kernel = functools.partial(_tap_kernel, loss_fn)

    emb, pred = pl.pallas_call(
        kernel,
        grid=grid,
        in_specs=[
            pl.BlockSpec((bb, tb, D), lambda b, t: (b, t, 0)),  # streamed activation
            pl.BlockSpec((D, S), lambda b, t: (0, 0)),          # resident weights
            pl.BlockSpec((1, S), lambda b, t: (0, 0)),          # resident bias
            pl.BlockSpec((S, N), lambda b, t: (0, 0)),          # resident pred weights
        ],
        out_specs=(
            pl.BlockSpec((bb, S), lambda b, t: (b, 0)),         # resident across T
            pl.BlockSpec((bb, N), lambda b, t: (b, 0)),
        ),
        out_shape=(
            jax.ShapeDtypeStruct((B_pad, S), jnp.float32),
            jax.ShapeDtypeStruct((B_pad, N), jnp.float32),
        ),
        scratch_shapes=[pltpu.VMEM((bb, D), jnp.float32)],
        compiler_params=pltpu.CompilerParams(
            dimension_semantics=("parallel", "arbitrary"),
        ),
    )(x, we_t, be, wp_t)

    # Matches spkr_embedding.view(B, -1) / spkr_pred.view(B, -1)
    return emb[:B].reshape(B, -1), pred[:B].reshape(B, -1)


def _reference(x, w_emb, b_emb, w_pred, loss_fn):
    xf = x.astype(jnp.float32)
    tap = jnp.mean(xf, axis=-2)
    emb = tap @ w_emb.T + b_emb
    if loss_fn == "softmax":
        pred = jax.nn.softmax(emb @ w_pred.T, axis=-1)
    else:
        emb = emb / jnp.maximum(jnp.linalg.norm(emb, axis=-1, keepdims=True), 1e-12)
        pred = emb @ w_pred.T
    return emb, pred


def _run_case(key, B, T, D, S, N, x_dtype, block_t):
    kx, kw1, kb1, kw2 = jax.random.split(key, 4)
    x = jax.random.normal(kx, (B, T, D), dtype=jnp.float32).astype(x_dtype)
    w_emb = jax.random.normal(kw1, (S, D), dtype=jnp.float32) * 0.1
    b_emb = jax.random.normal(kb1, (S,), dtype=jnp.float32) * 0.1
    w_pred = jax.random.normal(kw2, (N, S), dtype=jnp.float32) * 0.1

    ok = True
    for loss_fn in ("softmax", "amsoftmax"):
        emb, pred = tap_simple_forward(x, w_emb, b_emb, w_pred,
                                       loss_fn=loss_fn, block_t=block_t)
        jax.block_until_ready((emb, pred))
        emb_ref, pred_ref = _reference(x, w_emb, b_emb, w_pred, loss_fn)
        ok &= bool(jnp.allclose(emb, emb_ref, atol=1e-4, rtol=1e-4))
        ok &= bool(jnp.allclose(pred, pred_ref, atol=1e-3, rtol=1e-3))
    return ok


if __name__ == "__main__":
    key = jax.random.PRNGKey(0)
    k1, k2 = jax.random.split(key)

    ok = True
    # Lane-dense shapes (D/S/N multiples of 128), bf16 activations, T tiled
    # into 4 reduction steps to exercise the streaming accumulator pipeline.
    ok &= _run_case(k1, B=4, T=64, D=128, S=128, N=128,
                    x_dtype=jnp.bfloat16, block_t=16)
    # Tiny shapes from the module's defaults: full-extent (non-128) lane dims.
    ok &= _run_case(k2, B=2, T=8, D=32, S=32, N=16,
                    x_dtype=jnp.float32, block_t=256)

    print("KERNEL_OK" if ok else "KERNEL_MISMATCH")
</pallas_src>

<mosaic_0001>
module attributes {stable_mosaic.version = 11 : i64} {
  func.func @_tap_kernel(%arg0: i32, %arg1: i32, %arg2: memref<8x16x128xbf16, #tpu.memory_space<vmem>>, %arg3: memref<128x128xf32, #tpu.memory_space<vmem>>, %arg4: memref<1x128xf32, #tpu.memory_space<vmem>>, %arg5: memref<128x128xf32, #tpu.memory_space<vmem>>, %arg6: memref<8x128xf32, #tpu.memory_space<vmem>>, %arg7: memref<8x128xf32, #tpu.memory_space<vmem>>, %arg8: memref<8x128xf32, #tpu.memory_space<vmem>>) attributes {dimension_semantics = [#tpu.dimension_semantics<parallel>, #tpu.dimension_semantics<arbitrary>], iteration_bounds = array<i64: 1, 4>, scalar_prefetch = 0 : i64, scratch_operands = 1 : i64, tpu.core_type = #tpu.core_type<tc>, window_params = [{transform_indices = @transform_0, window_bounds = array<i64: 8, 16, 128>}, {pipeline_mode = #tpu.pipeline_mode<synchronous>, transform_indices = @transform_1, window_bounds = array<i64: 128, 128>}, {pipeline_mode = #tpu.pipeline_mode<synchronous>, transform_indices = @transform_2, window_bounds = array<i64: 1, 128>}, {pipeline_mode = #tpu.pipeline_mode<synchronous>, transform_indices = @transform_3, window_bounds = array<i64: 128, 128>}, {transform_indices = @transform_4, window_bounds = array<i64: 8, 128>}, {transform_indices = @transform_5, window_bounds = array<i64: 8, 128>}]} {
    %c0_i32 = arith.constant 0 : i32
    %0 = arith.cmpi eq, %arg1, %c0_i32 : i32
    %1 = arith.extui %0 : i1 to i32
    %c0_i32_0 = arith.constant 0 : i32
    %2 = arith.cmpi ne, %1, %c0_i32_0 : i32
    scf.if %2 {
      %cst_8 = arith.constant 0.000000e+00 : f32
      %12 = vector.broadcast %cst_8 : f32 to vector<8x128xf32>
      %c0_9 = arith.constant 0 : index
      %c0_10 = arith.constant 0 : index
      %13 = vector.load %arg8[%c0_9, %c0_10] : memref<8x128xf32, #tpu.memory_space<vmem>>, vector<8x128xf32>
      tpu.vector_store %arg8[%c0_9, %c0_10], %12 {strides = array<i32>} : memref<8x128xf32, #tpu.memory_space<vmem>>, vector<8x128xf32>,
    } else {
    }
    %c0 = arith.constant 0 : index
    %c0_1 = arith.constant 0 : index
    %3 = vector.load %arg8[%c0, %c0_1] : memref<8x128xf32, #tpu.memory_space<vmem>>, vector<8x128xf32>
    %c0_2 = arith.constant 0 : index
    %c0_3 = arith.constant 0 : index
    %c0_4 = arith.constant 0 : index
    %4 = vector.load %arg2[%c0_2, %c0_3, %c0_4] : memref<8x16x128xbf16, #tpu.memory_space<vmem>>, vector<8x16x128xbf16>
    %5 = arith.extf %4 : vector<8x16x128xbf16> to vector<8x16x128xf32>
    %cst = arith.constant dense<0.000000e+00> : vector<8x128xf32>
    %6 = vector.multi_reduction <add>, %5, %cst [1] : vector<8x16x128xf32> to vector<8x128xf32>
    %7 = arith.addf %3, %6 : vector<8x128xf32>
    %c0_5 = arith.constant 0 : index
    %c0_6 = arith.constant 0 : index
    %8 = vector.load %arg8[%c0_5, %c0_6] : memref<8x128xf32, #tpu.memory_space<vmem>>, vector<8x128xf32>
    tpu.vector_store %arg8[%c0_5, %c0_6], %7 {strides = array<i32>} : memref<8x128xf32, #tpu.memory_space<vmem>>, vector<8x128xf32>,
    %c3_i32 = arith.constant 3 : i32
    %9 = arith.cmpi eq, %arg1, %c3_i32 : i32
    %10 = arith.extui %9 : i1 to i32
    %c0_i32_7 = arith.constant 0 : i32
    %11 = arith.cmpi ne, %10, %c0_i32_7 : i32
    scf.if %11 {
      %c0_8 = arith.constant 0 : index
      %c0_9 = arith.constant 0 : index
      %12 = vector.load %arg8[%c0_8, %c0_9] : memref<8x128xf32, #tpu.memory_space<vmem>>, vector<8x128xf32>
      %c0_10 = arith.constant 0 : index
      %c0_11 = arith.constant 0 : index
      %13 = vector.load %arg3[%c0_10, %c0_11] : memref<128x128xf32, #tpu.memory_space<vmem>>, vector<128x128xf32>
      %cst_12 = arith.constant dense<0.000000e+00> : vector<8x128xf32>
      %14 = tpu.matmul %12, %13, %cst_12 {dimension_numbers = #tpu.dot_dimension_numbers<[1], [0], [0], [1], [0, 0, 1, 1], [], []>} : vector<8x128xf32>, vector<128x128xf32>, vector<8x128xf32> -> vector<8x128xf32>
      %c0_13 = arith.constant 0 : index
      %c0_14 = arith.constant 0 : index
      %15 = vector.load %arg4[%c0_13, %c0_14] : memref<1x128xf32, #tpu.memory_space<vmem>>, vector<1x128xf32>
      %16 = vector.broadcast %15 : vector<1x128xf32> to vector<8x128xf32>
      %17 = arith.addf %14, %16 : vector<8x128xf32>
      %c0_15 = arith.constant 0 : index
      %c0_16 = arith.constant 0 : index
      %18 = vector.load %arg5[%c0_15, %c0_16] : memref<128x128xf32, #tpu.memory_space<vmem>>, vector<128x128xf32>
      %cst_17 = arith.constant dense<0.000000e+00> : vector<8x128xf32>
      %19 = tpu.matmul %17, %18, %cst_17 {dimension_numbers = #tpu.dot_dimension_numbers<[1], [0], [0], [1], [0, 0, 1, 1], [], []>} : vector<8x128xf32>, vector<128x128xf32>, vector<8x128xf32> -> vector<8x128xf32>
      %cst_18 = arith.constant dense<0xFF800000> : vector<8xf32>
      %20 = vector.multi_reduction <maximumf>, %19, %cst_18 [1] : vector<8x128xf32> to vector<8xf32>
      %21 = vector.shape_cast %20 : vector<8xf32> to vector<8x1xf32>
      %22 = vector.broadcast %21 : vector<8x1xf32> to vector<8x128xf32>
      %23 = arith.subf %19, %22 : vector<8x128xf32>
      %24 = math.exp %23 : vector<8x128xf32>
      %cst_19 = arith.constant dense<0.000000e+00> : vector<8xf32>
      %25 = vector.multi_reduction <add>, %24, %cst_19 [1] : vector<8x128xf32> to vector<8xf32>
      %26 = vector.shape_cast %25 : vector<8xf32> to vector<8x1xf32>
      %27 = tpu.reciprocal %26 {approx = true} : vector<8x1xf32> -> vector<8x1xf32>
      %28 = vector.broadcast %27 : vector<8x1xf32> to vector<8x128xf32>
      %29 = arith.mulf %24, %28 : vector<8x128xf32>
      %c0_20 = arith.constant 0 : index
      %c0_21 = arith.constant 0 : index
      %30 = vector.load %arg6[%c0_20, %c0_21] : memref<8x128xf32, #tpu.memory_space<vmem>>, vector<8x128xf32>
      tpu.vector_store %arg6[%c0_20, %c0_21], %17 {strides = array<i32>} : memref<8x128xf32, #tpu.memory_space<vmem>>, vector<8x128xf32>,
      %c0_22 = arith.constant 0 : index
      %c0_23 = arith.constant 0 : index
      %31 = vector.load %arg7[%c0_22, %c0_23] : memref<8x128xf32, #tpu.memory_space<vmem>>, vector<8x128xf32>
      tpu.vector_store %arg7[%c0_22, %c0_23], %29 {strides = array<i32>} : memref<8x128xf32, #tpu.memory_space<vmem>>, vector<8x128xf32>,
    } else {
    }
    return
  }
  func.func @transform_0(%arg0: i32, %arg1: i32) -> (i32, i32, i32) {
    %c0_i32 = arith.constant 0 : i32
    %c0_i32_0 = arith.constant 0 : i32
    return %arg0, %arg1, %c0_i32 : i32, i32, i32
  }
  func.func @transform_1(%arg0: i32, %arg1: i32) -> (i32, i32) {
    %c0_i32 = arith.constant 0 : i32
    %c0_i32_0 = arith.constant 0 : i32
    %c0_i32_1 = arith.constant 0 : i32
    return %c0_i32, %c0_i32_0 : i32, i32
  }
  func.func @transform_2(%arg0: i32, %arg1: i32) -> (i32, i32) {
    %c0_i32 = arith.constant 0 : i32
    %c0_i32_0 = arith.constant 0 : i32
    %c0_i32_1 = arith.constant 0 : i32
    return %c0_i32, %c0_i32_0 : i32, i32
  }
  func.func @transform_3(%arg0: i32, %arg1: i32) -> (i32, i32) {
    %c0_i32 = arith.constant 0 : i32
    %c0_i32_0 = arith.constant 0 : i32
    %c0_i32_1 = arith.constant 0 : i32
    return %c0_i32, %c0_i32_0 : i32, i32
  }
  func.func @transform_4(%arg0: i32, %arg1: i32) -> (i32, i32) {
    %c0_i32 = arith.constant 0 : i32
    %c0_i32_0 = arith.constant 0 : i32
    return %arg0, %c0_i32 : i32, i32
  }
  func.func @transform_5(%arg0: i32, %arg1: i32) -> (i32, i32) {
    %c0_i32 = arith.constant 0 : i32
    %c0_i32_0 = arith.constant 0 : i32
    return %arg0, %c0_i32 : i32, i32
  }
}

</mosaic_0001>

<llo_original>
// kernel: tpu_custom_call.1
$region0: #{tpu_custom_call.1}
  #allocation0 [shape = 'u32[]', space=smem, size = 0x4, offset = 0x4, fixed_abs, tag = 'smem constant byte address 0x4 - core index']
  #allocation1 [shape = 'u32[144,128]{1,0:T(1,128)}', space=vmem, size = 0x12000, scoped, tag = 'internal scratch']
  #allocation2 [shape = 'f32[8,128]{1,0:T(8,128)}', space=vmem, size = 0x1000, scoped, tag = 'scratch operand']
  #allocation12 [shape = 's32[]', space=sflag, size = 0x4, offset = 0, fixed_abs, tag = 'sflag constant byte address 0x0 - dummy sync flag']
  %s0 = inlined_call_operand.hbm [shape: bf16[8,64,128], index: 0, kind: input, shape index: {}]
  %s1 = inlined_call_operand.hbm [shape: f32[128,128], index: 1, kind: input, shape index: {}]
  %s2 = inlined_call_operand.vmem [shape: f32[1,128], index: 2, kind: input, shape index: {}]
  %s3 = inlined_call_operand.hbm [shape: f32[128,128], index: 3, kind: input, shape index: {}]
  %s4 = inlined_call_operand.hbm [shape: f32[8,128], index: 4, kind: output, shape index: {0}]
  %s5 = inlined_call_operand.hbm [shape: f32[8,128], index: 5, kind: output, shape index: {1}]
  %6 = xla_tuple %s4, %s5
  %s7 = sld [smem:[#allocation0]]
  $region77: #{tpu_custom_call.1} parent=0
    _
  %s9 = ssub.s32 1, %s7
  %s10 = scalar_select 0, %s9, %s7
  $region1: #{tpu_custom_call.1} parent=0
    #allocation3 [shape = 'u8[65536]{0}', space=vmem, size = 0x10000, scoped, tag = 'input window, operand 0']
    #allocation4 [shape = 's32[2]{0}', space=sflag, size = 0x8, scoped, tag = 'scoped memory for tpu_custom_call.1']
    #allocation5 [shape = 's32[2]{0}', space=sflag, size = 0x8, scoped, tag = 'scoped memory for tpu_custom_call.1']
    #allocation6 [shape = 'u8[65536]{0}', space=vmem, size = 0x10000, scoped, tag = 'input window, operand 1, single buffered']
    #allocation7 [shape = 's32[1]{0}', space=sflag, size = 0x4, scoped, tag = 'scoped memory for tpu_custom_call.1']
    #allocation8 [shape = 'u8[65536]{0}', space=vmem, size = 0x10000, scoped, tag = 'input window, operand 3, single buffered']
    #allocation9 [shape = 'u8[4096]{0}', space=vmem, size = 0x1000, scoped, tag = 'output window, operand 0, single buffered']
    #allocation10 [shape = 'u8[4096]{0}', space=vmem, size = 0x1000, scoped, tag = 'output window, operand 1, single buffered']
    #allocation11 [shape = 's32[1]{0}', space=sflag, size = 0x4, scoped, tag = 'scoped memory for tpu_custom_call.1']
    %11 = vsyncpa [#allocation4], 0
    %s12 = scalar_lea.sflag [#allocation4], 1
    %13 = vsyncpa %s12, 0
    %14 = vsyncpa [#allocation7], 0
    %15 = vsyncpa [#allocation5], 0
    %16 = vsyncpa [#allocation11], 0
    loop: start=0, step=1, limit=6
    $region2: #{tpu_custom_call.1} parent=1 // loop_pre_header
      _
    $region3: #{tpu_custom_call.1} parent=1 // loop_header
      %s18 = sphi 0, %s22
      %p19 = scmp.ge.s32.totalorder %s18, 6
      %s25 = sphi 0, %s37
      %s26 = sphi 0, %s33
      %s27 = sphi 0, %s25
      %s28 = sphi 0, %s26
      %s29 = sphi 0, %s27
      %s30 = sphi 0, %s28
      %s42 = sphi 0, %s44
      %s45 = sphi 0, %s42
      %s46 = sphi 0, %s45
      %s62 = sphi 0, %s46
      %s66 = sphi 0, %s66
      %s68 = sphi 0, %s66
      %s69 = sphi 0, %s68
      %s83 = sphi 0, %s69
      %s87 = sphi 0, %s87
      %s89 = sphi 0, %s87
      %s90 = sphi 0, %s89
      %s104 = sphi 0, %s90
      %s108 = sphi 0, %s108
      %s110 = sphi 0, %s108
      %s111 = sphi 0, %s110
      %s125 = sphi 0, %s111
      %s131 = sphi 0, %s133
      %s134 = sphi 0, %s131
      %s135 = sphi 0, %s134
      %s151 = sphi 0, %s135
      %s157 = sphi 0, %s159
      %s160 = sphi 0, %s157
      %s161 = sphi 0, %s160
      %s177 = sphi 0, %s161
    $region4: #{tpu_custom_call.1} parent=1 // loop_header_branch
      %21 = sbr.rel (%p19) target = $region8
    $region5: #{tpu_custom_call.1} parent=1 // loop_body
      %s23 = ssub.s32 %s18, 1
      %s24 = ssub.s32 %s18, 2
      %s31 = sadd.s32 1, %s26
      %p32 = scmp.ge.s32.totalorder %s31, 4
      %s33 = scalar_select %p32, 0, %s31
      %s34 = sadd.s32 1, %s25
      %s35 = scalar_select %p32, %s34, %s25
      %p36 = scmp.ge.s32.totalorder %s35, 1
      %s37 = scalar_select %p36, 0, %s35
      %s38 = ssub.s32 %s25, %s37
      %s39 = ssub.s32 %s26, %s33
      %s40 = sor.u32 %s38, %s39
      %p41 = scmp.eq.s32.totalorder %s40, 0
      %s43 = sadd.s32 %s42, 1
      %s44 = scalar_select %p41, %s42, %s43
      %p47 = pneg %p41
      %p48 = scmp.eq.s32.totalorder %s18, 3
      %p49 = por %p47, %p48
      %p50 = scmp.ne.s32.totalorder %s42, %s45
      %p51 = scmp.eq.s32.totalorder %s18, 0
      %p52 = por %p50, %p51
      %p53 = scmp.ne.s32.totalorder %s42, %s45
      %p54 = scmp.eq.s32.totalorder %s23, 3
      %p55 = por %p53, %p54
      %p56 = scmp.ne.s32.totalorder %s45, %s46
      %p57 = scmp.eq.s32.totalorder %s23, 0
      %p58 = por %p56, %p57
      %p59 = scmp.ne.s32.totalorder %s45, %s46
      %p60 = scmp.eq.s32.totalorder %s24, 3
      %p61 = por %p59, %p60
      %p63 = scmp.ne.s32.totalorder %s46, %s62
      %p64 = scmp.eq.s32.totalorder %s24, 0
      %p65 = por %p63, %p64
      %s67 = sadd.s32 %s66, 1
      %p70 = scmp.eq.s32.totalorder %s18, 3
      %p71 = scmp.ne.s32.totalorder %s66, %s68
      %p72 = scmp.eq.s32.totalorder %s18, 0
      %p73 = por %p71, %p72
      %p74 = scmp.ne.s32.totalorder %s66, %s68
      %p75 = scmp.eq.s32.totalorder %s23, 3
      %p76 = por %p74, %p75
      %p77 = scmp.ne.s32.totalorder %s68, %s69
      %p78 = scmp.eq.s32.totalorder %s23, 0
      %p79 = por %p77, %p78
      %p80 = scmp.ne.s32.totalorder %s68, %s69
      %p81 = scmp.eq.s32.totalorder %s24, 3
      %p82 = por %p80, %p81
      %p84 = scmp.ne.s32.totalorder %s69, %s83
      %p85 = scmp.eq.s32.totalorder %s24, 0
      %p86 = por %p84, %p85
      %s88 = sadd.s32 %s87, 1
      %p91 = scmp.eq.s32.totalorder %s18, 3
      %p92 = scmp.ne.s32.totalorder %s87, %s89
      %p93 = scmp.eq.s32.totalorder %s18, 0
      %p94 = por %p92, %p93
      %p95 = scmp.ne.s32.totalorder %s87, %s89
      %p96 = scmp.eq.s32.totalorder %s23, 3
      %p97 = por %p95, %p96
      %p98 = scmp.ne.s32.totalorder %s89, %s90
      %p99 = scmp.eq.s32.totalorder %s23, 0
      %p100 = por %p98, %p99
      %p101 = scmp.ne.s32.totalorder %s89, %s90
      %p102 = scmp.eq.s32.totalorder %s24, 3
      %p103 = por %p101, %p102
      %p105 = scmp.ne.s32.totalorder %s90, %s104
      %p106 = scmp.eq.s32.totalorder %s24, 0
      %p107 = por %p105, %p106
      %s109 = sadd.s32 %s108, 1
      %p112 = scmp.eq.s32.totalorder %s18, 3
      %p113 = scmp.ne.s32.totalorder %s108, %s110
      %p114 = scmp.eq.s32.totalorder %s18, 0
      %p115 = por %p113, %p114
      %p116 = scmp.ne.s32.totalorder %s108, %s110
      %p117 = scmp.eq.s32.totalorder %s23, 3
      %p118 = por %p116, %p117
      %p119 = scmp.ne.s32.totalorder %s110, %s111
      %p120 = scmp.eq.s32.totalorder %s23, 0
      %p121 = por %p119, %p120
      %p122 = scmp.ne.s32.totalorder %s110, %s111
      %p123 = scmp.eq.s32.totalorder %s24, 3
      %p124 = por %p122, %p123
      %p126 = scmp.ne.s32.totalorder %s111, %s125
      %p127 = scmp.eq.s32.totalorder %s24, 0
      %p128 = por %p126, %p127
      %s129 = ssub.s32 %s25, %s37
      %p130 = scmp.eq.s32.totalorder %s129, 0
      %s132 = sadd.s32 %s131, 1
      %s133 = scalar_select %p130, %s131, %s132
      %p136 = pneg %p130
      %p137 = scmp.eq.s32.totalorder %s18, 3
      %p138 = por %p136, %p137
      %p139 = scmp.ne.s32.totalorder %s131, %s134
      %p140 = scmp.eq.s32.totalorder %s18, 0
      %p141 = por %p139, %p140
      %p142 = scmp.ne.s32.totalorder %s131, %s134
      %p143 = scmp.eq.s32.totalorder %s23, 3
      %p144 = por %p142, %p143
      %p145 = scmp.ne.s32.totalorder %s134, %s135
      %p146 = scmp.eq.s32.totalorder %s23, 0
      %p147 = por %p145, %p146
      %p148 = scmp.ne.s32.totalorder %s134, %s135
      %p149 = scmp.eq.s32.totalorder %s24, 3
      %p150 = por %p148, %p149
      %p152 = scmp.ne.s32.totalorder %s135, %s151
      %p153 = scmp.eq.s32.totalorder %s24, 0
      %p154 = por %p152, %p153
      %s155 = ssub.s32 %s25, %s37
      %p156 = scmp.eq.s32.totalorder %s155, 0
      %s158 = sadd.s32 %s157, 1
      %s159 = scalar_select %p156, %s157, %s158
      %p162 = pneg %p156
      %p163 = scmp.eq.s32.totalorder %s18, 3
      %p164 = por %p162, %p163
      %p165 = scmp.ne.s32.totalorder %s157, %s160
      %p166 = scmp.eq.s32.totalorder %s18, 0
      %p167 = por %p165, %p166
      %p168 = scmp.ne.s32.totalorder %s157, %s160
      %p169 = scmp.eq.s32.totalorder %s23, 3
      %p170 = por %p168, %p169
      %p171 = scmp.ne.s32.totalorder %s160, %s161
      %p172 = scmp.eq.s32.totalorder %s23, 0
      %p173 = por %p171, %p172
      %p174 = scmp.ne.s32.totalorder %s160, %s161
      %p175 = scmp.eq.s32.totalorder %s24, 3
      %p176 = por %p174, %p175
      %p178 = scmp.ne.s32.totalorder %s161, %s177
      %p179 = scmp.eq.s32.totalorder %s24, 0
      %p180 = por %p178, %p179
      %p181 = scmp.le.s32.totalorder 1, %s18
      %p182 = scmp.lt.s32.totalorder %s18, 5
      %p183 = pnand %p181, %p182
      %p184 = pneg %p183
      // Predicated region
      $region9: #{tpu_custom_call.1} parent=5 // pred_check
        _
      $region10: #{tpu_custom_call.1} parent=5 // pred_check_branch
        %186 = sbr.rel (%p183) target = $region12
      $region11: #{tpu_custom_call.1} parent=5 // pred_region
        %s187 = ssub.s32 %s18, 1
        // Predicated region
        $region13: #{tpu_custom_call.1} parent=11 // pred_check
          %p188 = pneg %p79
        $region14: #{tpu_custom_call.1} parent=11 // pred_check_branch
          %190 = sbr.rel (%p188) target = $region16
        $region15: #{tpu_custom_call.1} parent=11 // pred_region
          %s192 = ssub.s32 2048, 2048
          %193 = vsyncadd [#allocation7], %s192
          %s194 = sshll.u32 [#allocation6], 4
          %s195 = int_to_ptr.vmem [resolvable:$true] %s194
          %200 = dma.hbm_to_vmem [thread:$0]  %s1, 2048, %s195, [#allocation7], 128, 128, 8
        $region16: #{tpu_custom_call.1} parent=11 // pred_fallthru
          _
        // Predicated region
        $region17: #{tpu_custom_call.1} parent=11 // pred_check
          %p201 = pneg %p100
        $region18: #{tpu_custom_call.1} parent=11 // pred_check_branch
          %203 = sbr.rel (%p201) target = $region20
        $region19: #{tpu_custom_call.1} parent=11 // pred_region
          _
        $region20: #{tpu_custom_call.1} parent=11 // pred_fallthru
          _
        // Predicated region
        $region21: #{tpu_custom_call.1} parent=11 // pred_check
          %p204 = pneg %p121
        $region22: #{tpu_custom_call.1} parent=11 // pred_check_branch
          %206 = sbr.rel (%p204) target = $region24
        $region23: #{tpu_custom_call.1} parent=11 // pred_region
          %s208 = ssub.s32 2048, 2048
          %209 = vsyncadd [#allocation7], %s208
          %s210 = sshll.u32 [#allocation8], 4
          %s211 = int_to_ptr.vmem [resolvable:$true] %s210
          %216 = dma.hbm_to_vmem [thread:$0]  %s3, 2048, %s211, [#allocation7], 128, 128, 8
        $region24: #{tpu_custom_call.1} parent=11 // pred_fallthru
          _
      $region12: #{tpu_custom_call.1} parent=5 // pred_fallthru
        _
      %p217 = scmp.lt.s32.totalorder %s18, 4
      // Predicated region
      $region25: #{tpu_custom_call.1} parent=5 // pred_check
        %p218 = pneg %p217
      $region26: #{tpu_custom_call.1} parent=5 // pred_check_branch
        %220 = sbr.rel (%p218) target = $region28
      $region27: #{tpu_custom_call.1} parent=5 // pred_region
        // Predicated region
        $region29: #{tpu_custom_call.1} parent=27 // pred_check
          %p221 = pneg %p52
        $region30: #{tpu_custom_call.1} parent=27 // pred_check_branch
          %223 = sbr.rel (%p221) target = $region32
        $region31: #{tpu_custom_call.1} parent=27 // pred_region
          #allocation13 [shape = 'u32[6]{0}', space=smem, size = 0x18, scoped, tag = 'DMA stride descriptor']
          %s224 = sand.u32 %s42, 1
          %s225 = scalar_lea.sflag [#allocation4], %s224
          %s226 = sand.u32 %s42, 1
          %s227 = smul.addr %s226, 64
          %s228 = scalar_lea.vmem [#allocation3], %s227
          %s229 = smul.u32 8, %s25
          %s230 = smul.u32 2, %s26
          %s232 = ssub.s32 1024, 1024
          %233 = vsyncadd %s225, %s232
          %s234 = smul.addr %s229, 8
          %s235 = sadd.s32 %s230, %s234
          %s236 = smul.addr %s235, 64
          %s237 = scalar_lea.hbm %s0, %s236
          %s239 = sshll.u32 1, 14
          %s240 = sxor.u32 4294967295, %s239
          %s242 = sld [smem:[#allocation0]]
          %s243 = sadd.s32 2, %s242
          %s245 = sshll.u32 7, 26
          %s246 = sxor.u32 4294967295, %s245
          %s247 = sand.u32 0, %s246
          %s248 = sshll.u32 %s243, 26
          %s249 = sor.u32 %s247, %s248
          %s250 = sshll.u32 %s228, 4
          %s251 = int_to_ptr.vmem [resolvable:$true] %s250
          %257 = sst [smem:[#allocation13]] 512
          %s258 = scalar_lea.smem [#allocation13], 1
          %259 = sst [smem:[%s258]] 128
          %s260 = scalar_lea.smem [#allocation13], 2
          %261 = sst [smem:[%s260]] 2
          %s262 = scalar_lea.smem [#allocation13], 3
          %263 = sst [smem:[%s262]] 64
          %s264 = scalar_lea.smem [#allocation13], 4
          %265 = sst [smem:[%s264]] 64
          %s266 = scalar_lea.smem [#allocation13], 5
          %267 = sst [smem:[%s266]] 4
          %269 = dma.general %s237, 1024, %s251, %s225, [#allocation12], [#allocation13], %s249, 0
        $region32: #{tpu_custom_call.1} parent=27 // pred_fallthru
          _
      $region28: #{tpu_custom_call.1} parent=5 // pred_fallthru
        _
      %p270 = scmp.le.s32.totalorder 1, %s18
      %p271 = scmp.lt.s32.totalorder %s18, 5
      %p272 = pnand %p270, %p271
      %p273 = pneg %p272
      // Predicated region
      $region33: #{tpu_custom_call.1} parent=5 // pred_check
        _
      $region34: #{tpu_custom_call.1} parent=5 // pred_check_branch
        %275 = sbr.rel (%p272) target = $region36
      $region35: #{tpu_custom_call.1} parent=5 // pred_region
        %s276 = ssub.s32 %s18, 1
        %s277 = sand.u32 %s45, 1
        %s278 = scalar_lea.sflag [#allocation4], %s277
        %s279 = sand.u32 %s45, 1
        %s280 = smul.addr %s279, 64
        %s281 = scalar_lea.vmem [#allocation3], %s280
        // Predicated region
        $region37: #{tpu_custom_call.1} parent=35 // pred_check
          %p282 = pneg %p58
        $region38: #{tpu_custom_call.1} parent=35 // pred_check_branch
          %284 = sbr.rel (%p282) target = $region40
        $region39: #{tpu_custom_call.1} parent=35 // pred_region
          %285 = dma.done %s278, 1024
        $region40: #{tpu_custom_call.1} parent=35 // pred_fallthru
          _
        // Predicated region
        $region41: #{tpu_custom_call.1} parent=35 // pred_check
          %p286 = pneg %p79
        $region42: #{tpu_custom_call.1} parent=35 // pred_check_branch
          %288 = sbr.rel (%p286) target = $region44
        $region43: #{tpu_custom_call.1} parent=35 // pred_region
          %289 = dma.done [#allocation7], 2048
        $region44: #{tpu_custom_call.1} parent=35 // pred_fallthru
          _
        // Predicated region
        $region45: #{tpu_custom_call.1} parent=35 // pred_check
          %p290 = pneg %p121
        $region46: #{tpu_custom_call.1} parent=35 // pred_check_branch
          %292 = sbr.rel (%p290) target = $region48
        $region47: #{tpu_custom_call.1} parent=35 // pred_region
          %293 = dma.done [#allocation7], 2048
        $region48: #{tpu_custom_call.1} parent=35 // pred_fallthru
          _
        %s294 = sand.u32 %s45, 1
        %s295 = scalar_lea.sflag [#allocation4], %s294
        %s296 = sand.u32 %s45, 1
        %s297 = smul.addr %s296, 64
        %s298 = scalar_lea.vmem [#allocation3], %s297
        %p299 = pneg %p58
        %p300 = pneg %p55
        %p301 = pneg %p79
        %p302 = pneg %p76
        %p303 = pneg %p100
        %p304 = pneg %p97
        %p305 = pneg %p121
        %p306 = pneg %p118
        %p307 = pneg %p147
        %p308 = pneg %p144
        %p309 = pneg %p173
        %p310 = pneg %p170
        %s311 = smul.u32 8, %s27
        %s312 = smul.u32 2, %s28
        %p313 = scmp.eq.s32.totalorder %s28, 0
        // Predicated region
        $region49: #{tpu_custom_call.1} parent=35 // pred_check
          %p314 = pneg %p313
        $region50: #{tpu_custom_call.1} parent=35 // pred_check_branch
          %316 = sbr.rel (%p314) target = $region52
        $region51: #{tpu_custom_call.1} parent=35 // pred_region
          %317 = vst [vmem:[#allocation2] sm:$0xff] 0.0
        $region52: #{tpu_custom_call.1} parent=35 // pred_fallthru
          _
        %v318 = vld [vmem:[#allocation2] sm:$0xff]
        %v319 = vld [vmem:[%s281] sm:$0xf]
        %v320 = vld [vmem:[%s281 + $0x4] sm:$0xf]
        %v321 = vld [vmem:[%s281 + $0x8] sm:$0xf]
        %v322 = vld [vmem:[%s281 + $0xc] sm:$0xf]
        %v323 = vld [vmem:[%s281 + $0x10] sm:$0xf]
        %v324 = vld [vmem:[%s281 + $0x14] sm:$0xf]
        %v325 = vld [vmem:[%s281 + $0x18] sm:$0xf]
        %v326 = vld [vmem:[%s281 + $0x1c] sm:$0xf]
        %v327 = vld [vmem:[%s281 + $0x20] sm:$0xf]
        %v328 = vld [vmem:[%s281 + $0x24] sm:$0xf]
        %v329 = vld [vmem:[%s281 + $0x28] sm:$0xf]
        %v330 = vld [vmem:[%s281 + $0x2c] sm:$0xf]
        %v331 = vld [vmem:[%s281 + $0x30] sm:$0xf]
        %v332 = vld [vmem:[%s281 + $0x34] sm:$0xf]
        %v333 = vld [vmem:[%s281 + $0x38] sm:$0xf]
        %v334 = vld [vmem:[%s281 + $0x3c] sm:$0xf]
        %v335 = vunpack.c.l.bf16 %v319
        %v336 = vunpack.c.l.bf16 %v320
        %v337 = vunpack.c.l.bf16 %v321
        %v338 = vunpack.c.l.bf16 %v322
        %v339 = vunpack.c.l.bf16 %v323
        %v340 = vunpack.c.l.bf16 %v324
        %v341 = vunpack.c.l.bf16 %v325
        %v342 = vunpack.c.l.bf16 %v326
        %v343 = vunpack.c.l.bf16 %v327
        %v344 = vunpack.c.l.bf16 %v328
        %v345 = vunpack.c.l.bf16 %v329
        %v346 = vunpack.c.l.bf16 %v330
        %v347 = vunpack.c.l.bf16 %v331
        %v348 = vunpack.c.l.bf16 %v332
        %v349 = vunpack.c.l.bf16 %v333
        %v350 = vunpack.c.l.bf16 %v334
        %v351 = vadd.f32 %v335, %v336
        %v352 = vrot.slane %v351, 4
        %v353 = vadd.f32 %v351, %v352
        %v354 = vrot.slane %v353, 2
        %v355 = vadd.f32 %v353, %v354
        %v356 = vrot.slane %v355, 1
        %v357 = vadd.f32 %v355, %v356
        %v358 = vadd.f32 %v337, %v338
        %v359 = vrot.slane %v358, 4
        %v360 = vadd.f32 %v358, %v359
        %v361 = vrot.slane %v360, 2
        %v362 = vadd.f32 %v360, %v361
        %v363 = vrot.slane %v362, 1
        %v364 = vadd.f32 %v362, %v363
        %v365 = vadd.f32 %v339, %v340
        %v366 = vrot.slane %v365, 4
        %v367 = vadd.f32 %v365, %v366
        %v368 = vrot.slane %v367, 2
        %v369 = vadd.f32 %v367, %v368
        %v370 = vrot.slane %v369, 1
        %v371 = vadd.f32 %v369, %v370
        %v372 = vadd.f32 %v341, %v342
        %v373 = vrot.slane %v372, 4
        %v374 = vadd.f32 %v372, %v373
        %v375 = vrot.slane %v374, 2
        %v376 = vadd.f32 %v374, %v375
        %v377 = vrot.slane %v376, 1
        %v378 = vadd.f32 %v376, %v377
        %v379 = vadd.f32 %v343, %v344
        %v380 = vrot.slane %v379, 4
        %v381 = vadd.f32 %v379, %v380
        %v382 = vrot.slane %v381, 2
        %v383 = vadd.f32 %v381, %v382
        %v384 = vrot.slane %v383, 1
        %v385 = vadd.f32 %v383, %v384
        %v386 = vadd.f32 %v345, %v346
        %v387 = vrot.slane %v386, 4
        %v388 = vadd.f32 %v386, %v387
        %v389 = vrot.slane %v388, 2
        %v390 = vadd.f32 %v388, %v389
        %v391 = vrot.slane %v390, 1
        %v392 = vadd.f32 %v390, %v391
        %v393 = vadd.f32 %v347, %v348
        %v394 = vrot.slane %v393, 4
        %v395 = vadd.f32 %v393, %v394
        %v396 = vrot.slane %v395, 2
        %v397 = vadd.f32 %v395, %v396
        %v398 = vrot.slane %v397, 1
        %v399 = vadd.f32 %v397, %v398
        %v400 = vadd.f32 %v349, %v350
        %v401 = vrot.slane %v400, 4
        %v402 = vadd.f32 %v400, %v401
        %v403 = vrot.slane %v402, 2
        %v404 = vadd.f32 %v402, %v403
        %v405 = vrot.slane %v404, 1
        %v406 = vadd.f32 %v404, %v405
        %vm415 = vcmask 1041409
        %v416 = vsel %vm415, %v364, %v357
        %vm417 = vcmask 1042434
        %v418 = vsel %vm417, %v371, %v416
        %vm419 = vcmask 1043459
        %v420 = vsel %vm419, %v378, %v418
        %vm421 = vcmask 1044484
        %v422 = vsel %vm421, %v385, %v420
        %vm423 = vcmask 1045509
        %v424 = vsel %vm423, %v392, %v422
        %vm425 = vcmask 1046534
        %v426 = vsel %vm425, %v399, %v424
        %vm427 = vcmask 1047559
        %v428 = vsel %vm427, %v406, %v426
        %v430 = vadd.f32 %v318, %v428
        %431 = vst [vmem:[#allocation2] sm:$0xff] %v430
        %p432 = scmp.eq.s32.totalorder %s28, 3
        // Predicated region
        $region53: #{tpu_custom_call.1} parent=35 // pred_check
          %p433 = pneg %p432
        $region54: #{tpu_custom_call.1} parent=35 // pred_check_branch
          %435 = sbr.rel (%p433) target = $region56
        $region55: #{tpu_custom_call.1} parent=35 // pred_region
          %v436 = vld [vmem:[#allocation2] sm:$0xff]
          %v437 = vld [vmem:[#allocation6] sm:$0xff]
          %v438 = vld [vmem:[#allocation6 + $0x8] sm:$0xff]
          %v439 = vld [vmem:[#allocation6 + $0x10] sm:$0xff]
          %v440 = vld [vmem:[#allocation6 + $0x18] sm:$0xff]
          %v441 = vld [vmem:[#allocation6 + $0x20] sm:$0xff]
          %v442 = vld [vmem:[#allocation6 + $0x28] sm:$0xff]
          %v443 = vld [vmem:[#allocation6 + $0x30] sm:$0xff]
          %v444 = vld [vmem:[#allocation6 + $0x38] sm:$0xff]
          %v445 = vld [vmem:[#allocation6 + $0x40] sm:$0xff]
          %v446 = vld [vmem:[#allocation6 + $0x48] sm:$0xff]
          %v447 = vld [vmem:[#allocation6 + $0x50] sm:$0xff]
          %v448 = vld [vmem:[#allocation6 + $0x58] sm:$0xff]
          %v449 = vld [vmem:[#allocation6 + $0x60] sm:$0xff]
          %v450 = vld [vmem:[#allocation6 + $0x68] sm:$0xff]
          %v451 = vld [vmem:[#allocation6 + $0x70] sm:$0xff]
          %v452 = vld [vmem:[#allocation6 + $0x78] sm:$0xff]
          %v453 = vld [vmem:[%s2] sm:$0x1]
          %v455 = vlaneseq
          %v456 = vshrl.u32 %v455, 7
          %v457 = vsub.s32 0, %v456
          %v458 = vrot.slane %v453, %v457
          %460 = vmatprep.subr.mxu0 0.0
          %461 = vmatpush1.msra.mxu0 %v437
          %462 = vmatprep.subr.mxu0 0.0
          %463 = vmatpush1.msra.mxu0 %v438
          %464 = vmatprep.subr.mxu0 0.0
          %465 = vmatpush1.msra.mxu0 %v439
          %466 = vmatprep.subr.mxu0 0.0
          %467 = vmatpush1.msra.mxu0 %v440
          %468 = vmatprep.subr.mxu0 0.0
          %469 = vmatpush1.msra.mxu0 %v441
          %470 = vmatprep.subr.mxu0 0.0
          %471 = vmatpush1.msra.mxu0 %v442
          %472 = vmatprep.subr.mxu0 0.0
          %473 = vmatpush1.msra.mxu0 %v443
          %474 = vmatprep.subr.mxu0 0.0
          %475 = vmatpush1.msra.mxu0 %v444
          %476 = vmatprep.subr.mxu0 0.0
          %477 = vmatpush1.msra.mxu0 %v445
          %478 = vmatprep.subr.mxu0 0.0
          %479 = vmatpush1.msra.mxu0 %v446
          %480 = vmatprep.subr.mxu0 0.0
          %481 = vmatpush1.msra.mxu0 %v447
          %482 = vmatprep.subr.mxu0 0.0
          %483 = vmatpush1.msra.mxu0 %v448
          %484 = vmatprep.subr.mxu0 0.0
          %485 = vmatpush1.msra.mxu0 %v449
          %486 = vmatprep.subr.mxu0 0.0
          %487 = vmatpush1.msra.mxu0 %v450
          %488 = vmatprep.subr.mxu0 0.0
          %489 = vmatpush1.msra.mxu0 %v451
          %490 = vmatprep.subr.mxu0 0.0
          %491 = vmatpush1.msra.mxu0 %v452
          %492 = vmatprep.subr.mxu0 0.0
          %493 = vmatpush1.msra.mxu0 0.0
          %494 = vmatprep.subr.mxu0 0.0
          %495 = vmatpush1.msra.mxu0 0.0
          %496 = vmatprep.subr.mxu0 0.0
          %497 = vmatpush1.msra.mxu0 0.0
          %498 = vmatprep.subr.mxu0 0.0
          %499 = vmatpush1.msra.mxu0 0.0
          %500 = vmatprep.subr.mxu0 0.0
          %501 = vmatpush1.msra.mxu0 0.0
          %502 = vmatprep.subr.mxu0 0.0
          %503 = vmatpush1.msra.mxu0 0.0
          %504 = vmatprep.subr.mxu0 0.0
          %505 = vmatpush1.msra.mxu0 0.0
          %506 = vmatprep.subr.mxu0 0.0
          %507 = vmatpush1.msra.mxu0 0.0
          %508 = vmatprep.subr.mxu0 0.0
          %509 = vmatpush1.msra.mxu0 0.0
          %510 = vmatprep.subr.mxu0 0.0
          %511 = vmatpush1.msra.mxu0 0.0
          %512 = vmatprep.subr.mxu0 0.0
          %513 = vmatpush1.msra.mxu0 0.0
          %514 = vmatprep.subr.mxu0 0.0
          %515 = vmatpush1.msra.mxu0 0.0
          %516 = vmatprep.subr.mxu0 0.0
          %517 = vmatpush1.msra.mxu0 0.0
          %518 = vmatprep.subr.mxu0 0.0
          %519 = vmatpush1.msra.mxu0 0.0
          %520 = vmatprep.subr.mxu0 0.0
          %521 = vmatpush1.msra.mxu0 0.0
          %522 = vmatprep.subr.mxu0 0.0
          %523 = vmatpush1.msra.mxu0 0.0
          %524 = vmatprep.mubr.f32.mxu0 0.0
          %525 = vmatmul.mubr.f32.gmra.mrb[0].mxu0 %v436
          %v526 = vpop.f32.mrb[0].mxu0
          %v527 = vadd.f32 %v458, %v526
          %v528 = vpop.f32.mrb[0].mxu0
          %529 = vdwg.mxu0
          %v530 = vld [vmem:[#allocation8] sm:$0xff]
          %v531 = vld [vmem:[#allocation8 + $0x8] sm:$0xff]
          %v532 = vld [vmem:[#allocation8 + $0x10] sm:$0xff]
          %v533 = vld [vmem:[#allocation8 + $0x18] sm:$0xff]
          %v534 = vld [vmem:[#allocation8 + $0x20] sm:$0xff]
          %v535 = vld [vmem:[#allocation8 + $0x28] sm:$0xff]
          %v536 = vld [vmem:[#allocation8 + $0x30] sm:$0xff]
          %v537 = vld [vmem:[#allocation8 + $0x38] sm:$0xff]
          %v538 = vld [vmem:[#allocation8 + $0x40] sm:$0xff]
          %v539 = vld [vmem:[#allocation8 + $0x48] sm:$0xff]
          %v540 = vld [vmem:[#allocation8 + $0x50] sm:$0xff]
          %v541 = vld [vmem:[#allocation8 + $0x58] sm:$0xff]
          %v542 = vld [vmem:[#allocation8 + $0x60] sm:$0xff]
          %v543 = vld [vmem:[#allocation8 + $0x68] sm:$0xff]
          %v544 = vld [vmem:[#allocation8 + $0x70] sm:$0xff]
          %v545 = vld [vmem:[#allocation8 + $0x78] sm:$0xff]
          %546 = vmatprep.subr.mxu0 0.0
          %547 = vmatpush1.msra.mxu0 %v530
          %548 = vmatprep.subr.mxu0 0.0
          %549 = vmatpush1.msra.mxu0 %v531
          %550 = vmatprep.subr.mxu0 0.0
          %551 = vmatpush1.msra.mxu0 %v532
          %552 = vmatprep.subr.mxu0 0.0
          %553 = vmatpush1.msra.mxu0 %v533
          %554 = vmatprep.subr.mxu0 0.0
          %555 = vmatpush1.msra.mxu0 %v534
          %556 = vmatprep.subr.mxu0 0.0
          %557 = vmatpush1.msra.mxu0 %v535
          %558 = vmatprep.subr.mxu0 0.0
          %559 = vmatpush1.msra.mxu0 %v536
          %560 = vmatprep.subr.mxu0 0.0
          %561 = vmatpush1.msra.mxu0 %v537
          %562 = vmatprep.subr.mxu0 0.0
          %563 = vmatpush1.msra.mxu0 %v538
          %564 = vmatprep.subr.mxu0 0.0
          %565 = vmatpush1.msra.mxu0 %v539
          %566 = vmatprep.subr.mxu0 0.0
          %567 = vmatpush1.msra.mxu0 %v540
          %568 = vmatprep.subr.mxu0 0.0
          %569 = vmatpush1.msra.mxu0 %v541
          %570 = vmatprep.subr.mxu0 0.0
          %571 = vmatpush1.msra.mxu0 %v542
          %572 = vmatprep.subr.mxu0 0.0
          %573 = vmatpush1.msra.mxu0 %v543
          %574 = vmatprep.subr.mxu0 0.0
          %575 = vmatpush1.msra.mxu0 %v544
          %576 = vmatprep.subr.mxu0 0.0
          %577 = vmatpush1.msra.mxu0 %v545
          %578 = vmatprep.subr.mxu0 0.0
          %579 = vmatpush1.msra.mxu0 0.0
          %580 = vmatprep.subr.mxu0 0.0
          %581 = vmatpush1.msra.mxu0 0.0
          %582 = vmatprep.subr.mxu0 0.0
          %583 = vmatpush1.msra.mxu0 0.0
          %584 = vmatprep.subr.mxu0 0.0
          %585 = vmatpush1.msra.mxu0 0.0
          %586 = vmatprep.subr.mxu0 0.0
          %587 = vmatpush1.msra.mxu0 0.0
          %588 = vmatprep.subr.mxu0 0.0
          %589 = vmatpush1.msra.mxu0 0.0
          %590 = vmatprep.subr.mxu0 0.0
          %591 = vmatpush1.msra.mxu0 0.0
          %592 = vmatprep.subr.mxu0 0.0
          %593 = vmatpush1.msra.mxu0 0.0
          %594 = vmatprep.subr.mxu0 0.0
          %595 = vmatpush1.msra.mxu0 0.0
          %596 = vmatprep.subr.mxu0 0.0
          %597 = vmatpush1.msra.mxu0 0.0
          %598 = vmatprep.subr.mxu0 0.0
          %599 = vmatpush1.msra.mxu0 0.0
          %600 = vmatprep.subr.mxu0 0.0
          %601 = vmatpush1.msra.mxu0 0.0
          %602 = vmatprep.subr.mxu0 0.0
          %603 = vmatpush1.msra.mxu0 0.0
          %604 = vmatprep.subr.mxu0 0.0
          %605 = vmatpush1.msra.mxu0 0.0
          %606 = vmatprep.subr.mxu0 0.0
          %607 = vmatpush1.msra.mxu0 0.0
          %608 = vmatprep.subr.mxu0 0.0
          %609 = vmatpush1.msra.mxu0 0.0
          %610 = vmatprep.mubr.f32.mxu0 0.0
          %611 = vmatmul.mubr.f32.gmra.mrb[0].mxu0 %v527
          %v612 = vpop.f32.mrb[0].mxu0
          %v613 = vadd.f32 0.0, %v612
          %v614 = vpop.f32.mrb[0].mxu0
          %615 = vdwg.mxu0
          %616 = vmax.xlane.f32.xlu0 %v613
          %v617 = vpop.xlane.xlu0 %616
          %v618 = vsub.f32 %v613, %v617
          %v619 = vmul.f32 %v618, 1.442695
          %v620 = vpow.pop %v619
          %621 = vadd.xlane.f32.xlu0 %v620
          %v622 = vpop.xlane.xlu0 %621
          %v623 = vrcp.pop %v622
          %v624 = vmul.f32 %v620, %v623
          %625 = vst [vmem:[#allocation9] sm:$0xff] %v527
          %626 = vst [vmem:[#allocation10] sm:$0xff] %v624
        $region56: #{tpu_custom_call.1} parent=35 // pred_fallthru
          _
        // Predicated region
        $region57: #{tpu_custom_call.1} parent=35 // pred_check
          %p627 = pneg %p144
        $region58: #{tpu_custom_call.1} parent=35 // pred_check_branch
          %629 = sbr.rel (%p627) target = $region60
        $region59: #{tpu_custom_call.1} parent=35 // pred_region
          %s631 = ssub.s32 128, 128
          %632 = vsyncadd [#allocation5], %s631
          %s633 = smul.addr %s27, 128
          %s634 = scalar_lea.hbm %s4, %s633
          %s636 = sshll.u32 [#allocation9], 4
          %s637 = int_to_ptr.vmem [resolvable:$true] %s636
          %639 = dma.vmem_to_hbm [thread:$0]  %s637, 128, %s634, [#allocation5]
        $region60: #{tpu_custom_call.1} parent=35 // pred_fallthru
          _
        // Predicated region
        $region61: #{tpu_custom_call.1} parent=35 // pred_check
          %p640 = pneg %p170
        $region62: #{tpu_custom_call.1} parent=35 // pred_check_branch
          %642 = sbr.rel (%p640) target = $region64
        $region63: #{tpu_custom_call.1} parent=35 // pred_region
          %s644 = ssub.s32 128, 128
          %645 = vsyncadd [#allocation11], %s644
          %s646 = smul.addr %s27, 128
          %s647 = scalar_lea.hbm %s5, %s646
          %s649 = sshll.u32 [#allocation10], 4
          %s650 = int_to_ptr.vmem [resolvable:$true] %s649
          %652 = dma.vmem_to_hbm [thread:$0]  %s650, 128, %s647, [#allocation11]
        $region64: #{tpu_custom_call.1} parent=35 // pred_fallthru
          _
        // Predicated region
        $region65: #{tpu_custom_call.1} parent=35 // pred_check
          %p653 = pneg %p144
        $region66: #{tpu_custom_call.1} parent=35 // pred_check_branch
          %655 = sbr.rel (%p653) target = $region68
        $region67: #{tpu_custom_call.1} parent=35 // pred_region
          %656 = dma.done [#allocation5], 128
        $region68: #{tpu_custom_call.1} parent=35 // pred_fallthru
          _
        // Predicated region
        $region69: #{tpu_custom_call.1} parent=35 // pred_check
          %p657 = pneg %p170
        $region70: #{tpu_custom_call.1} parent=35 // pred_check_branch
          %659 = sbr.rel (%p657) target = $region72
        $region71: #{tpu_custom_call.1} parent=35 // pred_region
          %660 = dma.done [#allocation11], 128
        $region72: #{tpu_custom_call.1} parent=35 // pred_fallthru
          _
      $region36: #{tpu_custom_call.1} parent=5 // pred_fallthru
        _
      %p661 = scmp.le.s32.totalorder 2, %s18
      // Predicated region
      $region73: #{tpu_custom_call.1} parent=5 // pred_check
        %p662 = pneg %p661
      $region74: #{tpu_custom_call.1} parent=5 // pred_check_branch
        %664 = sbr.rel (%p662) target = $region76
      $region75: #{tpu_custom_call.1} parent=5 // pred_region
        %s665 = ssub.s32 %s18, 2
      $region76: #{tpu_custom_call.1} parent=5 // pred_fallthru
        _
    $region6: #{tpu_custom_call.1} parent=1 // loop_footer
      %s22 = sadd.s32 1, %s18
    $region7: #{tpu_custom_call.1} parent=1 // loop_footer_branch
      %17 = sbr.rel target = $region3
    $region8: #{tpu_custom_call.1} parent=1 // loop_exit
      _
    %666 = vsyncpa [#allocation4], 1
    %s667 = scalar_lea.sflag [#allocation4], 1
    %668 = vsyncpa %s667, 1
    %669 = vsyncpa [#allocation7], 1
    %670 = vsyncpa [#allocation5], 1
    %s671 = scalar_lea.sflag [#allocation5], 1
    %672 = vsyncpa %s671, 1
    %673 = vsyncpa [#allocation11], 1

</llo_original>
